<compile_context>
chip_gen: v6e
topology: v6e:2x2x1
jax: 0.10.0
libtpu: 0.0.40
codegen_flags: <defaults>
</compile_context>

<pallas_src>
import functools

import jax
import jax.numpy as jnp
from jax.experimental import pallas as pl
from jax.experimental.pallas import tpu as pltpu


def _myloss_kernel(w_ref, pred_ref, trut_ref, out_ref, acc_ref, *,
                   H, W, n_int, n_all):
    i = pl.program_id(0)
    iRe = 1.0 / 400.0

    @pl.when(i == 0)
    def _init():
        acc_ref[0] = 0.0
        acc_ref[1] = 0.0

    p = pred_ref[...].astype(jnp.float32)   # (tn, C, H, W)
    t = trut_ref[...].astype(jnp.float32)
    d = t - p                               # difference field (linear terms + L1)

    # L1 over every element of the tile (all channels).
    l1_sum = jnp.sum(jnp.abs(d))

    um, vm = t[:, 0], t[:, 1]        # truth u, v           (tn, H, W)
    dum, dvm = d[:, 0], d[:, 1]      # (trut - pred) u, v   (tn, H, W)

    # Stencil neighbors via XLU rotations.  pltpu.roll matches jnp.roll:
    # out[i] = in[(i - shift) % n].  Wrap-around only lands on boundary
    # rows/cols, which the interior weight plane zeroes out.
    def nbrs(a):
        l = pltpu.roll(a, 1, 1)          # value at (h-1, w)
        r = pltpu.roll(a, H - 1, 1)      # value at (h+1, w)
        b = pltpu.roll(a, 1, 2)          # value at (h, w-1)
        tp = pltpu.roll(a, W - 1, 2)     # value at (h, w+1)
        return l, r, b, tp

    ul, ur, ub, ut = nbrs(um)
    vl, vr, vb, vt = nbrs(vm)
    dul, dur, dub, dut = nbrs(dum)
    dvl, dvr, dvb, dvt = nbrs(dvm)

    # ---- continuity (mass) residual: linear -> evaluate directly on d ----
    mass_res = 0.5 * ((dur - dul) + (dvt - dvb))

    # ---- viscous (Laplacian) residuals: linear -> evaluate directly on d ----
    lap_u = (dur + dul) + (dut + dub) - 4.0 * dum
    lap_v = (dvr + dvl) + (dvt + dvb) - 4.0 * dvm

    # ---- nonlinear advection difference without materializing prediction
    #      neighbors:  A*B - A'*B' = A*dB + dA*B - dA*dB  (pred = trut - d) ----
    def prod_diff(A, dA, B, dB):
        return A * dB + dA * B - dA * dB

    # u-momentum advection: 0.25*[(ur-ul)(ur+ul+2um)+(ut+um)(vt+vm)-(ub+um)(vb+vm)]
    adv_u = 0.25 * (
        prod_diff(ur - ul, dur - dul, ur + ul + 2.0 * um, dur + dul + 2.0 * dum)
        + prod_diff(ut + um, dut + dum, vt + vm, dvt + dvm)
        - prod_diff(ub + um, dub + dum, vb + vm, dvb + dvm))
    # v-momentum advection: 0.25*[(vt-vb)(vt+vb+2vm)+(vr+vm)(ur+um)-(vl+vm)(ul+um)]
    adv_v = 0.25 * (
        prod_diff(vt - vb, dvt - dvb, vt + vb + 2.0 * vm, dvt + dvb + 2.0 * dvm)
        + prod_diff(vr + vm, dvr + dvm, ur + um, dur + dum)
        - prod_diff(vl + vm, dvl + dvm, ul + um, dul + dum))

    res_u = adv_u - iRe * lap_u
    res_v = adv_v - iRe * lap_v

    # ---- interior-weighted physics reduction (weight plane precomputed) ----
    w = w_ref[0, 0]    # (H, W): 1.0 interior, 0.0 boundary
    phys_sum = jnp.sum(
        w * (jnp.abs(mass_res) + 5.0 * (jnp.abs(res_u) + jnp.abs(res_v))))

    acc_ref[0] = acc_ref[0] + phys_sum
    acc_ref[1] = acc_ref[1] + l1_sum

    @pl.when(i == pl.num_programs(0) - 1)
    def _finalize():
        # (5*lossMass + 25*lossMom + lossL1) / 3
        out_ref[0, 0] = (5.0 * acc_ref[0] / n_int + acc_ref[1] / n_all) / 3.0


def my_loss(pred, trut, *, batch_tile=None):
    assert pred.shape == trut.shape
    assert pred.ndim == 4 and pred.shape[1] >= 2
    N, C, H, W = pred.shape
    assert H >= 3 and W >= 3

    # Batch-tile selection: keep each input tile around <= ~2 MiB so that
    # 2 inputs x 2 pipeline buffers plus ~20 live f32 temporaries fit inside
    # v7x's 64 MiB physical / 32 MiB default-scoped VMEM; v5e/v6e (128 MiB)
    # could take larger tiles but this already amortizes the ~0.35 us/step
    # grid overhead.
    if batch_tile is None:
        bytes_per_sample = C * H * W * pred.dtype.itemsize
        batch_tile = max(1, (2 * 1024 * 1024) // max(1, bytes_per_sample))
    tn = max(1, min(N, batch_tile))
    while N % tn != 0:           # keep the grid exact (no ragged last tile)
        tn -= 1
    grid = (N // tn,)

    # Precomputed interior weight plane (replaces in-kernel iota/compare mask).
    wgt = jnp.zeros((1, 1, H, W), jnp.float32).at[:, :, 1:H - 1, 1:W - 1].set(1.0)

    kernel = functools.partial(
        _myloss_kernel, H=H, W=W,
        n_int=N * (H - 2) * (W - 2),
        n_all=N * C * H * W)

    out = pl.pallas_call(
        kernel,
        out_shape=jax.ShapeDtypeStruct((1, 1), jnp.float32),
        grid=grid,
        in_specs=[
            pl.BlockSpec((1, 1, H, W), lambda i: (0, 0, 0, 0)),    # weight plane
            pl.BlockSpec((tn, C, H, W), lambda i: (i, 0, 0, 0)),   # pred tile
            pl.BlockSpec((tn, C, H, W), lambda i: (i, 0, 0, 0)),   # trut tile
        ],
        out_specs=pl.BlockSpec(memory_space=pltpu.MemorySpace.SMEM),
        scratch_shapes=[pltpu.SMEM((2,), jnp.float32)],
        compiler_params=pltpu.CompilerParams(
            dimension_semantics=("arbitrary",),
            vmem_limit_bytes=32 * 1024 * 1024),
    )(wgt, pred, trut)
    return out[0, 0]


def _my_loss_ref(pred, trut):
    # Pure-JAX reference (mirrors the PyTorch forward) for a sanity check.
    pred = pred.astype(jnp.float32)
    trut = trut.astype(jnp.float32)
    N, C, H, W = pred.shape
    iRe = 1.0 / 400.0

    def st(a):
        u, v = a[:, 0], a[:, 1]
        return (u[:, 1:H-1, 1:W-1], v[:, 1:H-1, 1:W-1],
                u[:, 0:H-2, 1:W-1], v[:, 0:H-2, 1:W-1],
                u[:, 2:H,   1:W-1], v[:, 2:H,   1:W-1],
                u[:, 1:H-1, 0:W-2], v[:, 1:H-1, 0:W-2],
                u[:, 1:H-1, 2:W],   v[:, 1:H-1, 2:W])

    um, vm, ul, vl, ur, vr, ub, vb, ut, vt = st(trut)
    um_, vm_, ul_, vl_, ur_, vr_, ub_, vb_, ut_, vt_ = st(pred)
    lossMass = jnp.mean(jnp.abs((ur - ul) * 0.5 + (vt - vb) * 0.5
                                - ((ur_ - ul_) * 0.5 + (vt_ - vb_) * 0.5)))
    du2dx = 0.25 * ((ur + um) ** 2 - (ul + um) ** 2)
    duvdy = 0.25 * ((ut + um) * (vt + vm) - (ub + um) * (vb + vm))
    dv2dy = 0.25 * ((vt + vm) ** 2 - (vb + vm) ** 2)
    dvudx = 0.25 * ((vr + vm) * (ur + um) - (vl + vm) * (ul + um))
    dudx2, dudy2 = ur - um * 2 + ul, ut - um * 2 + ub
    dvdx2, dvdy2 = vr - vm * 2 + vl, vt - vm * 2 + vb
    du_2dx = 0.25 * ((ur_ + um_) ** 2 - (ul_ + um_) ** 2)
    du_v_dy = 0.25 * ((ut_ + um_) * (vt_ + vm_) - (ub_ + um_) * (vb_ + vm_))
    dv_2dy = 0.25 * ((vt_ + vm_) ** 2 - (vb_ + vm_) ** 2)
    dv_u_dx = 0.25 * ((vr_ + vm_) * (ur_ + um_) - (vl_ + vm_) * (ul_ + um_))
    du_dx2, du_dy2 = ur_ - um_ * 2 + ul_, ut_ - um_ * 2 + ub_
    dv_dx2, dv_dy2 = vr_ - vm_ * 2 + vl_, vt_ - vm_ * 2 + vb_
    lossMom = jnp.mean(
        jnp.abs(du2dx + duvdy - (dudx2 + dudy2) * iRe
                - (du_2dx + du_v_dy - (du_dx2 + du_dy2) * iRe))
        + jnp.abs(dvudx + dv2dy - (dvdx2 + dvdy2) * iRe
                  - (dv_u_dx + dv_2dy - (dv_dx2 + dv_dy2) * iRe)))
    lossL1 = jnp.mean(jnp.abs(pred - trut))
    return (lossMass * 5 + lossMom * 25 + lossL1) / 3


if __name__ == "__main__":
    key = jax.random.PRNGKey(0)
    k1, k2 = jax.random.split(key)
    # (N, C, H, W) = (2, 2, 16, 16): channel 0 = u velocity, channel 1 = v velocity.
    pred = jax.random.normal(k1, (2, 2, 16, 16), dtype=jnp.float32)
    trut = jax.random.normal(k2, (2, 2, 16, 16), dtype=jnp.float32)

    ref = jax.block_until_ready(_my_loss_ref(pred, trut))
    loss = jax.block_until_ready(my_loss(pred, trut))                       # single-tile grid
    loss_tiled = jax.block_until_ready(my_loss(pred, trut, batch_tile=1))   # 2-step gridded path
    assert jnp.allclose(loss, ref, rtol=1e-4, atol=1e-5), (loss, ref)
    assert jnp.allclose(loss_tiled, ref, rtol=1e-4, atol=1e-5), (loss_tiled, ref)
    print("KERNEL_OK")
</pallas_src>

<mosaic_0001>
module attributes {stable_mosaic.version = 11 : i64} {
  func.func @_myloss_kernel(%arg0: i32, %arg1: memref<1x1x16x16xf32, #tpu.memory_space<vmem>>, %arg2: memref<2x2x16x16xf32, #tpu.memory_space<vmem>>, %arg3: memref<2x2x16x16xf32, #tpu.memory_space<vmem>>, %arg4: memref<1x1xf32, #tpu.memory_space<smem>>, %arg5: memref<2xf32, #tpu.memory_space<smem>>) attributes {dimension_semantics = [#tpu.dimension_semantics<arbitrary>], iteration_bounds = array<i64: 1>, scalar_prefetch = 0 : i64, scratch_operands = 1 : i64, tpu.core_type = #tpu.core_type<tc>, window_params = [{pipeline_mode = #tpu.pipeline_mode<synchronous>, transform_indices = @transform_0, window_bounds = array<i64: 1, 1, 16, 16>}, {transform_indices = @transform_1, window_bounds = array<i64: 2, 2, 16, 16>}, {transform_indices = @transform_2, window_bounds = array<i64: 2, 2, 16, 16>}, {transform_indices = @transform_3, window_bounds = array<i64: 1, 1>}]} {
    %c0_i32 = arith.constant 0 : i32
    %0 = arith.cmpi eq, %arg0, %c0_i32 : i32
    %1 = arith.extui %0 : i1 to i32
    %c0_i32_0 = arith.constant 0 : i32
    %2 = arith.cmpi ne, %1, %c0_i32_0 : i32
    scf.if %2 {
      %cst_44 = arith.constant 0.000000e+00 : f32
      %c0_45 = arith.constant 0 : index
      %157 = memref.load %arg5[%c0_45] : memref<2xf32, #tpu.memory_space<smem>>
      memref.store %cst_44, %arg5[%c0_45] : memref<2xf32, #tpu.memory_space<smem>>
      %cst_46 = arith.constant 0.000000e+00 : f32
      %c1_47 = arith.constant 1 : index
      %158 = memref.load %arg5[%c1_47] : memref<2xf32, #tpu.memory_space<smem>>
      memref.store %cst_46, %arg5[%c1_47] : memref<2xf32, #tpu.memory_space<smem>>
    } else {
    }
    %c0 = arith.constant 0 : index
    %c0_1 = arith.constant 0 : index
    %c0_2 = arith.constant 0 : index
    %c0_3 = arith.constant 0 : index
    %3 = vector.load %arg2[%c0, %c0_1, %c0_2, %c0_3] : memref<2x2x16x16xf32, #tpu.memory_space<vmem>>, vector<2x2x16x16xf32>
    %c0_4 = arith.constant 0 : index
    %c0_5 = arith.constant 0 : index
    %c0_6 = arith.constant 0 : index
    %c0_7 = arith.constant 0 : index
    %4 = vector.load %arg3[%c0_4, %c0_5, %c0_6, %c0_7] : memref<2x2x16x16xf32, #tpu.memory_space<vmem>>, vector<2x2x16x16xf32>
    %5 = arith.subf %4, %3 : vector<2x2x16x16xf32>
    %6 = math.absf %5 : vector<2x2x16x16xf32>
    %7 = vector.shape_cast %6 : vector<2x2x16x16xf32> to vector<1x2x2x16x16xf32>
    %cst = arith.constant dense<0.000000e+00> : vector<1xf32>
    %8 = vector.multi_reduction <add>, %7, %cst [1, 2, 3, 4] : vector<1x2x2x16x16xf32> to vector<1xf32>
    %9 = vector.shape_cast %8 : vector<1xf32> to vector<1x1x1x1x1xf32>
    %10 = vector.extract %9[0, 0, 0, 0, 0] : f32 from vector<1x1x1x1x1xf32>
    %11 = vector.extract_strided_slice %4 {offsets = [0, 0, 0, 0], sizes = [2, 1, 16, 16], strides = [1, 1, 1, 1]} : vector<2x2x16x16xf32> to vector<2x1x16x16xf32>
    %12 = vector.shape_cast %11 : vector<2x1x16x16xf32> to vector<2x16x16xf32>
    %13 = vector.extract_strided_slice %4 {offsets = [0, 1, 0, 0], sizes = [2, 1, 16, 16], strides = [1, 1, 1, 1]} : vector<2x2x16x16xf32> to vector<2x1x16x16xf32>
    %14 = vector.shape_cast %13 : vector<2x1x16x16xf32> to vector<2x16x16xf32>
    %15 = vector.extract_strided_slice %5 {offsets = [0, 0, 0, 0], sizes = [2, 1, 16, 16], strides = [1, 1, 1, 1]} : vector<2x2x16x16xf32> to vector<2x1x16x16xf32>
    %16 = vector.shape_cast %15 : vector<2x1x16x16xf32> to vector<2x16x16xf32>
    %17 = vector.extract_strided_slice %5 {offsets = [0, 1, 0, 0], sizes = [2, 1, 16, 16], strides = [1, 1, 1, 1]} : vector<2x2x16x16xf32> to vector<2x1x16x16xf32>
    %18 = vector.shape_cast %17 : vector<2x1x16x16xf32> to vector<2x16x16xf32>
    %c1_i32 = arith.constant 1 : i32
    %19 = tpu.dynamic_rotate %12 by %c1_i32 dim 1 : vector<2x16x16xf32>, i32 -> vector<2x16x16xf32>
    %c15_i32 = arith.constant 15 : i32
    %20 = tpu.dynamic_rotate %12 by %c15_i32 dim 1 : vector<2x16x16xf32>, i32 -> vector<2x16x16xf32>
    %c1_i32_8 = arith.constant 1 : i32
    %21 = tpu.dynamic_rotate %12 by %c1_i32_8 dim 2 : vector<2x16x16xf32>, i32 -> vector<2x16x16xf32>
    %c15_i32_9 = arith.constant 15 : i32
    %22 = tpu.dynamic_rotate %12 by %c15_i32_9 dim 2 : vector<2x16x16xf32>, i32 -> vector<2x16x16xf32>
    %c1_i32_10 = arith.constant 1 : i32
    %23 = tpu.dynamic_rotate %14 by %c1_i32_10 dim 1 : vector<2x16x16xf32>, i32 -> vector<2x16x16xf32>
    %c15_i32_11 = arith.constant 15 : i32
    %24 = tpu.dynamic_rotate %14 by %c15_i32_11 dim 1 : vector<2x16x16xf32>, i32 -> vector<2x16x16xf32>
    %c1_i32_12 = arith.constant 1 : i32
    %25 = tpu.dynamic_rotate %14 by %c1_i32_12 dim 2 : vector<2x16x16xf32>, i32 -> vector<2x16x16xf32>
    %c15_i32_13 = arith.constant 15 : i32
    %26 = tpu.dynamic_rotate %14 by %c15_i32_13 dim 2 : vector<2x16x16xf32>, i32 -> vector<2x16x16xf32>
    %c1_i32_14 = arith.constant 1 : i32
    %27 = tpu.dynamic_rotate %16 by %c1_i32_14 dim 1 : vector<2x16x16xf32>, i32 -> vector<2x16x16xf32>
    %c15_i32_15 = arith.constant 15 : i32
    %28 = tpu.dynamic_rotate %16 by %c15_i32_15 dim 1 : vector<2x16x16xf32>, i32 -> vector<2x16x16xf32>
    %c1_i32_16 = arith.constant 1 : i32
    %29 = tpu.dynamic_rotate %16 by %c1_i32_16 dim 2 : vector<2x16x16xf32>, i32 -> vector<2x16x16xf32>
    %c15_i32_17 = arith.constant 15 : i32
    %30 = tpu.dynamic_rotate %16 by %c15_i32_17 dim 2 : vector<2x16x16xf32>, i32 -> vector<2x16x16xf32>
    %c1_i32_18 = arith.constant 1 : i32
    %31 = tpu.dynamic_rotate %18 by %c1_i32_18 dim 1 : vector<2x16x16xf32>, i32 -> vector<2x16x16xf32>
    %c15_i32_19 = arith.constant 15 : i32
    %32 = tpu.dynamic_rotate %18 by %c15_i32_19 dim 1 : vector<2x16x16xf32>, i32 -> vector<2x16x16xf32>
    %c1_i32_20 = arith.constant 1 : i32
    %33 = tpu.dynamic_rotate %18 by %c1_i32_20 dim 2 : vector<2x16x16xf32>, i32 -> vector<2x16x16xf32>
    %c15_i32_21 = arith.constant 15 : i32
    %34 = tpu.dynamic_rotate %18 by %c15_i32_21 dim 2 : vector<2x16x16xf32>, i32 -> vector<2x16x16xf32>
    %35 = arith.subf %28, %27 : vector<2x16x16xf32>
    %36 = arith.subf %34, %33 : vector<2x16x16xf32>
    %37 = arith.addf %35, %36 : vector<2x16x16xf32>
    %cst_22 = arith.constant 5.000000e-01 : f32
    %38 = vector.broadcast %cst_22 : f32 to vector<2x16x16xf32>
    %39 = arith.mulf %38, %37 : vector<2x16x16xf32>
    %40 = arith.addf %28, %27 : vector<2x16x16xf32>
    %41 = arith.addf %30, %29 : vector<2x16x16xf32>
    %42 = arith.addf %40, %41 : vector<2x16x16xf32>
    %cst_23 = arith.constant 4.000000e+00 : f32
    %43 = vector.broadcast %cst_23 : f32 to vector<2x16x16xf32>
    %44 = arith.mulf %43, %16 : vector<2x16x16xf32>
    %45 = arith.subf %42, %44 : vector<2x16x16xf32>
    %46 = arith.addf %32, %31 : vector<2x16x16xf32>
    %47 = arith.addf %34, %33 : vector<2x16x16xf32>
    %48 = arith.addf %46, %47 : vector<2x16x16xf32>
    %cst_24 = arith.constant 4.000000e+00 : f32
    %49 = vector.broadcast %cst_24 : f32 to vector<2x16x16xf32>
    %50 = arith.mulf %49, %18 : vector<2x16x16xf32>
    %51 = arith.subf %48, %50 : vector<2x16x16xf32>
    %52 = arith.subf %20, %19 : vector<2x16x16xf32>
    %53 = arith.subf %28, %27 : vector<2x16x16xf32>
    %54 = arith.addf %20, %19 : vector<2x16x16xf32>
    %cst_25 = arith.constant 2.000000e+00 : f32
    %55 = vector.broadcast %cst_25 : f32 to vector<2x16x16xf32>
    %56 = arith.mulf %55, %12 : vector<2x16x16xf32>
    %57 = arith.addf %54, %56 : vector<2x16x16xf32>
    %58 = arith.addf %28, %27 : vector<2x16x16xf32>
    %cst_26 = arith.constant 2.000000e+00 : f32
    %59 = vector.broadcast %cst_26 : f32 to vector<2x16x16xf32>
    %60 = arith.mulf %59, %16 : vector<2x16x16xf32>
    %61 = arith.addf %58, %60 : vector<2x16x16xf32>
    %62 = arith.mulf %52, %61 : vector<2x16x16xf32>
    %63 = arith.mulf %53, %57 : vector<2x16x16xf32>
    %64 = arith.addf %62, %63 : vector<2x16x16xf32>
    %65 = arith.mulf %53, %61 : vector<2x16x16xf32>
    %66 = arith.subf %64, %65 : vector<2x16x16xf32>
    %67 = arith.addf %22, %12 : vector<2x16x16xf32>
    %68 = arith.addf %30, %16 : vector<2x16x16xf32>
    %69 = arith.addf %26, %14 : vector<2x16x16xf32>
    %70 = arith.addf %34, %18 : vector<2x16x16xf32>
    %71 = arith.mulf %67, %70 : vector<2x16x16xf32>
    %72 = arith.mulf %68, %69 : vector<2x16x16xf32>
    %73 = arith.addf %71, %72 : vector<2x16x16xf32>
    %74 = arith.mulf %68, %70 : vector<2x16x16xf32>
    %75 = arith.subf %73, %74 : vector<2x16x16xf32>
    %76 = arith.addf %66, %75 : vector<2x16x16xf32>
    %77 = arith.addf %21, %12 : vector<2x16x16xf32>
    %78 = arith.addf %29, %16 : vector<2x16x16xf32>
    %79 = arith.addf %25, %14 : vector<2x16x16xf32>
    %80 = arith.addf %33, %18 : vector<2x16x16xf32>
    %81 = arith.mulf %77, %80 : vector<2x16x16xf32>
    %82 = arith.mulf %78, %79 : vector<2x16x16xf32>
    %83 = arith.addf %81, %82 : vector<2x16x16xf32>
    %84 = arith.mulf %78, %80 : vector<2x16x16xf32>
    %85 = arith.subf %83, %84 : vector<2x16x16xf32>
    %86 = arith.subf %76, %85 : vector<2x16x16xf32>
    %cst_27 = arith.constant 2.500000e-01 : f32
    %87 = vector.broadcast %cst_27 : f32 to vector<2x16x16xf32>
    %88 = arith.mulf %87, %86 : vector<2x16x16xf32>
    %89 = arith.subf %26, %25 : vector<2x16x16xf32>
    %90 = arith.subf %34, %33 : vector<2x16x16xf32>
    %91 = arith.addf %26, %25 : vector<2x16x16xf32>
    %cst_28 = arith.constant 2.000000e+00 : f32
    %92 = vector.broadcast %cst_28 : f32 to vector<2x16x16xf32>
    %93 = arith.mulf %92, %14 : vector<2x16x16xf32>
    %94 = arith.addf %91, %93 : vector<2x16x16xf32>
    %95 = arith.addf %34, %33 : vector<2x16x16xf32>
    %cst_29 = arith.constant 2.000000e+00 : f32
    %96 = vector.broadcast %cst_29 : f32 to vector<2x16x16xf32>
    %97 = arith.mulf %96, %18 : vector<2x16x16xf32>
    %98 = arith.addf %95, %97 : vector<2x16x16xf32>
    %99 = arith.mulf %89, %98 : vector<2x16x16xf32>
    %100 = arith.mulf %90, %94 : vector<2x16x16xf32>
    %101 = arith.addf %99, %100 : vector<2x16x16xf32>
    %102 = arith.mulf %90, %98 : vector<2x16x16xf32>
    %103 = arith.subf %101, %102 : vector<2x16x16xf32>
    %104 = arith.addf %24, %14 : vector<2x16x16xf32>
    %105 = arith.addf %32, %18 : vector<2x16x16xf32>
    %106 = arith.addf %20, %12 : vector<2x16x16xf32>
    %107 = arith.addf %28, %16 : vector<2x16x16xf32>
    %108 = arith.mulf %104, %107 : vector<2x16x16xf32>
    %109 = arith.mulf %105, %106 : vector<2x16x16xf32>
    %110 = arith.addf %108, %109 : vector<2x16x16xf32>
    %111 = arith.mulf %105, %107 : vector<2x16x16xf32>
    %112 = arith.subf %110, %111 : vector<2x16x16xf32>
    %113 = arith.addf %103, %112 : vector<2x16x16xf32>
    %114 = arith.addf %23, %14 : vector<2x16x16xf32>
    %115 = arith.addf %31, %18 : vector<2x16x16xf32>
    %116 = arith.addf %19, %12 : vector<2x16x16xf32>
    %117 = arith.addf %27, %16 : vector<2x16x16xf32>
    %118 = arith.mulf %114, %117 : vector<2x16x16xf32>
    %119 = arith.mulf %115, %116 : vector<2x16x16xf32>
    %120 = arith.addf %118, %119 : vector<2x16x16xf32>
    %121 = arith.mulf %115, %117 : vector<2x16x16xf32>
    %122 = arith.subf %120, %121 : vector<2x16x16xf32>
    %123 = arith.subf %113, %122 : vector<2x16x16xf32>
    %cst_30 = arith.constant 2.500000e-01 : f32
    %124 = vector.broadcast %cst_30 : f32 to vector<2x16x16xf32>
    %125 = arith.mulf %124, %123 : vector<2x16x16xf32>
    %cst_31 = arith.constant 2.500000e-03 : f32
    %126 = vector.broadcast %cst_31 : f32 to vector<2x16x16xf32>
    %127 = arith.mulf %126, %45 : vector<2x16x16xf32>
    %128 = arith.subf %88, %127 : vector<2x16x16xf32>
    %cst_32 = arith.constant 2.500000e-03 : f32
    %129 = vector.broadcast %cst_32 : f32 to vector<2x16x16xf32>
    %130 = arith.mulf %129, %51 : vector<2x16x16xf32>
    %131 = arith.subf %125, %130 : vector<2x16x16xf32>
    %c0_33 = arith.constant 0 : index
    %c0_34 = arith.constant 0 : index
    %c0_35 = arith.constant 0 : index
    %c0_36 = arith.constant 0 : index
    %132 = vector.load %arg1[%c0_33, %c0_34, %c0_35, %c0_36] : memref<1x1x16x16xf32, #tpu.memory_space<vmem>>, vector<1x1x16x16xf32>
    %133 = vector.shape_cast %132 : vector<1x1x16x16xf32> to vector<16x16xf32>
    %134 = math.absf %39 : vector<2x16x16xf32>
    %135 = math.absf %128 : vector<2x16x16xf32>
    %136 = math.absf %131 : vector<2x16x16xf32>
    %137 = arith.addf %135, %136 : vector<2x16x16xf32>
    %cst_37 = arith.constant 5.000000e+00 : f32
    %138 = vector.broadcast %cst_37 : f32 to vector<2x16x16xf32>
    %139 = arith.mulf %138, %137 : vector<2x16x16xf32>
    %140 = arith.addf %134, %139 : vector<2x16x16xf32>
    %141 = vector.shape_cast %133 : vector<16x16xf32> to vector<1x16x16xf32>
    %142 = vector.broadcast %141 : vector<1x16x16xf32> to vector<2x16x16xf32>
    %143 = arith.mulf %142, %140 : vector<2x16x16xf32>
    %144 = vector.shape_cast %143 : vector<2x16x16xf32> to vector<1x2x16x16xf32>
    %cst_38 = arith.constant dense<0.000000e+00> : vector<1xf32>
    %145 = vector.multi_reduction <add>, %144, %cst_38 [1, 2, 3] : vector<1x2x16x16xf32> to vector<1xf32>
    %146 = vector.shape_cast %145 : vector<1xf32> to vector<1x1x1x1xf32>
    %147 = vector.extract %146[0, 0, 0, 0] : f32 from vector<1x1x1x1xf32>
    %c0_39 = arith.constant 0 : index
    %148 = memref.load %arg5[%c0_39] : memref<2xf32, #tpu.memory_space<smem>>
    %149 = arith.addf %148, %147 : f32
    %c0_40 = arith.constant 0 : index
    %150 = memref.load %arg5[%c0_40] : memref<2xf32, #tpu.memory_space<smem>>
    memref.store %149, %arg5[%c0_40] : memref<2xf32, #tpu.memory_space<smem>>
    %c1 = arith.constant 1 : index
    %151 = memref.load %arg5[%c1] : memref<2xf32, #tpu.memory_space<smem>>
    %152 = arith.addf %151, %10 : f32
    %c1_41 = arith.constant 1 : index
    %153 = memref.load %arg5[%c1_41] : memref<2xf32, #tpu.memory_space<smem>>
    memref.store %152, %arg5[%c1_41] : memref<2xf32, #tpu.memory_space<smem>>
    %c0_i32_42 = arith.constant 0 : i32
    %154 = arith.cmpi eq, %arg0, %c0_i32_42 : i32
    %155 = arith.extui %154 : i1 to i32
    %c0_i32_43 = arith.constant 0 : i32
    %156 = arith.cmpi ne, %155, %c0_i32_43 : i32
    scf.if %156 {
      %c0_44 = arith.constant 0 : index
      %157 = memref.load %arg5[%c0_44] : memref<2xf32, #tpu.memory_space<smem>>
      %cst_45 = arith.constant 5.000000e+00 : f32
      %158 = arith.mulf %cst_45, %157 : f32
      %cst_46 = arith.constant 3.920000e+02 : f32
      %159 = arith.divf %158, %cst_46 : f32
      %c1_47 = arith.constant 1 : index
      %160 = memref.load %arg5[%c1_47] : memref<2xf32, #tpu.memory_space<smem>>
      %cst_48 = arith.constant 1.024000e+03 : f32
      %161 = arith.divf %160, %cst_48 : f32
      %162 = arith.addf %159, %161 : f32
      %cst_49 = arith.constant 3.000000e+00 : f32
      %163 = arith.divf %162, %cst_49 : f32
      %c0_50 = arith.constant 0 : index
      %c0_51 = arith.constant 0 : index
      %164 = memref.load %arg4[%c0_50, %c0_51] : memref<1x1xf32, #tpu.memory_space<smem>>
      memref.store %163, %arg4[%c0_50, %c0_51] : memref<1x1xf32, #tpu.memory_space<smem>>
    } else {
    }
    return
  }
  func.func @transform_0(%arg0: i32) -> (i32, i32, i32, i32) {
    %c0_i32 = arith.constant 0 : i32
    %c0_i32_0 = arith.constant 0 : i32
    %c0_i32_1 = arith.constant 0 : i32
    %c0_i32_2 = arith.constant 0 : i32
    %c0_i32_3 = arith.constant 0 : i32
    return %c0_i32, %c0_i32_0, %c0_i32_1, %c0_i32_2 : i32, i32, i32, i32
  }
  func.func @transform_1(%arg0: i32) -> (i32, i32, i32, i32) {
    %c0_i32 = arith.constant 0 : i32
    %c0_i32_0 = arith.constant 0 : i32
    %c0_i32_1 = arith.constant 0 : i32
    %c0_i32_2 = arith.constant 0 : i32
    return %arg0, %c0_i32, %c0_i32_0, %c0_i32_1 : i32, i32, i32, i32
  }
  func.func @transform_2(%arg0: i32) -> (i32, i32, i32, i32) {
    %c0_i32 = arith.constant 0 : i32
    %c0_i32_0 = arith.constant 0 : i32
    %c0_i32_1 = arith.constant 0 : i32
    %c0_i32_2 = arith.constant 0 : i32
    return %arg0, %c0_i32, %c0_i32_0, %c0_i32_1 : i32, i32, i32, i32
  }
  func.func @transform_3(%arg0: i32) -> (i32, i32) {
    %c0_i32 = arith.constant 0 : i32
    %c0_i32_0 = arith.constant 0 : i32
    %c0_i32_1 = arith.constant 0 : i32
    return %c0_i32, %c0_i32_0 : i32, i32
  }
}

</mosaic_0001>

<llo_original>
// kernel: tpu_custom_call.1
$region0: #{tpu_custom_call.1}
  #allocation0 [shape = 'u32[]', space=smem, size = 0x4, offset = 0x4, fixed_abs, tag = 'smem constant byte address 0x4 - core index']
  #allocation1 [shape = 'u32[144,128]{1,0:T(1,128)}', space=vmem, size = 0x12000, scoped, tag = 'internal scratch']
  #allocation2 [shape = 'f32[2]{0:T(128)}', space=smem, size = 0x200, scoped, tag = 'scratch operand']
  %s0 = inlined_call_operand.hbm [shape: f32[1,1,16,16], index: 0, kind: input, shape index: {}]
  %s1 = inlined_call_operand.hbm [shape: f32[2,2,16,16], index: 1, kind: input, shape index: {}]
  %s2 = inlined_call_operand.hbm [shape: f32[2,2,16,16], index: 2, kind: input, shape index: {}]
  %s3 = inlined_call_operand.hbm [shape: f32[1,1], index: 3, kind: output, shape index: {}]
  %s4 = sld [smem:[#allocation0]]
  $region42: #{tpu_custom_call.1} parent=0
    _
  %s6 = ssub.s32 1, %s4
  %s7 = scalar_select 0, %s6, %s4
  $region1: #{tpu_custom_call.1} parent=0
    #allocation3 [shape = 'u8[8192]{0}', space=vmem, size = 0x2000, scoped, tag = 'input window, operand 0, single buffered']
    #allocation4 [shape = 's32[1]{0}', space=sflag, size = 0x4, scoped, tag = 'scoped memory for tpu_custom_call.1']
    #allocation5 [shape = 's32[1]{0}', space=sflag, size = 0x4, scoped, tag = 'scoped memory for tpu_custom_call.1']
    #allocation6 [shape = 'u8[32768]{0}', space=vmem, size = 0x8000, scoped, tag = 'input window, operand 1, single buffered']
    #allocation7 [shape = 's32[1]{0}', space=sflag, size = 0x4, scoped, tag = 'scoped memory for tpu_custom_call.1']
    #allocation8 [shape = 'u8[32768]{0}', space=vmem, size = 0x8000, scoped, tag = 'input window, operand 2, single buffered']
    #allocation9 [shape = 'u8[512]{0}', space=smem, size = 0x200, scoped, tag = 'output window, operand 0, single buffered']
    %8 = vsyncpa [#allocation4], 0
    %9 = vsyncpa [#allocation7], 0
    %10 = vsyncpa [#allocation5], 0
    // Predicated region
    $region2: #{tpu_custom_call.1} parent=1 // pred_check
      _
    $region3: #{tpu_custom_call.1} parent=1 // pred_check_branch
      %12 = sbr.rel (0) target = $region5
    $region4: #{tpu_custom_call.1} parent=1 // pred_region
      %s14 = ssub.s32 256, 256
      %15 = vsyncadd [#allocation4], %s14
      %s16 = sshll.u32 [#allocation3], 4
      %s17 = int_to_ptr.vmem [resolvable:$true] %s16
      %22 = dma.hbm_to_vmem [thread:$0]  %s0, 256, %s17, [#allocation4], 128, 128, 8
    $region5: #{tpu_custom_call.1} parent=1 // pred_fallthru
      _
    // Predicated region
    $region6: #{tpu_custom_call.1} parent=1 // pred_check
      _
    $region7: #{tpu_custom_call.1} parent=1 // pred_check_branch
      %24 = sbr.rel (0) target = $region9
    $region8: #{tpu_custom_call.1} parent=1 // pred_region
      %s26 = ssub.s32 1024, 1024
      %27 = vsyncadd [#allocation7], %s26
      %s28 = sshll.u32 [#allocation6], 4
      %s29 = int_to_ptr.vmem [resolvable:$true] %s28
      %34 = dma.hbm_to_vmem [thread:$0]  %s1, 1024, %s29, [#allocation7], 128, 128, 8
    $region9: #{tpu_custom_call.1} parent=1 // pred_fallthru
      _
    // Predicated region
    $region10: #{tpu_custom_call.1} parent=1 // pred_check
      _
    $region11: #{tpu_custom_call.1} parent=1 // pred_check_branch
      %36 = sbr.rel (0) target = $region13
    $region12: #{tpu_custom_call.1} parent=1 // pred_region
      %s38 = ssub.s32 1024, 1024
      %39 = vsyncadd [#allocation7], %s38
      %s40 = sshll.u32 [#allocation8], 4
      %s41 = int_to_ptr.vmem [resolvable:$true] %s40
      %46 = dma.hbm_to_vmem [thread:$0]  %s2, 1024, %s41, [#allocation7], 128, 128, 8
    $region13: #{tpu_custom_call.1} parent=1 // pred_fallthru
      _
    // Predicated region
    $region14: #{tpu_custom_call.1} parent=1 // pred_check
      _
    $region15: #{tpu_custom_call.1} parent=1 // pred_check_branch
      %48 = sbr.rel (0) target = $region17
    $region16: #{tpu_custom_call.1} parent=1 // pred_region
      %49 = dma.done [#allocation4], 256
    $region17: #{tpu_custom_call.1} parent=1 // pred_fallthru
      _
    // Predicated region
    $region18: #{tpu_custom_call.1} parent=1 // pred_check
      _
    $region19: #{tpu_custom_call.1} parent=1 // pred_check_branch
      %51 = sbr.rel (0) target = $region21
    $region20: #{tpu_custom_call.1} parent=1 // pred_region
      %52 = dma.done [#allocation7], 1024
    $region21: #{tpu_custom_call.1} parent=1 // pred_fallthru
      _
    // Predicated region
    $region22: #{tpu_custom_call.1} parent=1 // pred_check
      _
    $region23: #{tpu_custom_call.1} parent=1 // pred_check_branch
      %54 = sbr.rel (0) target = $region25
    $region24: #{tpu_custom_call.1} parent=1 // pred_region
      %55 = dma.done [#allocation7], 1024
    $region25: #{tpu_custom_call.1} parent=1 // pred_fallthru
      _
    %p56 = scmp.eq.s32.totalorder 0, 0
    // Predicated region
    $region26: #{tpu_custom_call.1} parent=1 // pred_check
      %p57 = pneg %p56
    $region27: #{tpu_custom_call.1} parent=1 // pred_check_branch
      %59 = sbr.rel (%p57) target = $region29
    $region28: #{tpu_custom_call.1} parent=1 // pred_region
      %s60 = scalar_lea.smem [#allocation2], 0
      %61 = sst [smem:[%s60]] 0.0
      %s62 = scalar_lea.smem [#allocation2], 1
      %63 = sst [smem:[%s62]] 0.0
    $region29: #{tpu_custom_call.1} parent=1 // pred_fallthru
      _
    %v64 = vld [vmem:[#allocation6] sm:$0xff]
    %v65 = vld [vmem:[#allocation6 + $0x8] sm:$0xff]
    %v66 = vld [vmem:[#allocation6 + $0x10] sm:$0xff]
    %v67 = vld [vmem:[#allocation6 + $0x18] sm:$0xff]
    %v68 = vld [vmem:[#allocation6 + $0x20] sm:$0xff]
    %v69 = vld [vmem:[#allocation6 + $0x28] sm:$0xff]
    %v70 = vld [vmem:[#allocation6 + $0x30] sm:$0xff]
    %v71 = vld [vmem:[#allocation6 + $0x38] sm:$0xff]
    %v72 = vld [vmem:[#allocation8] sm:$0xff]
    %v73 = vld [vmem:[#allocation8 + $0x8] sm:$0xff]
    %v74 = vld [vmem:[#allocation8 + $0x10] sm:$0xff]
    %v75 = vld [vmem:[#allocation8 + $0x18] sm:$0xff]
    %v76 = vld [vmem:[#allocation8 + $0x20] sm:$0xff]
    %v77 = vld [vmem:[#allocation8 + $0x28] sm:$0xff]
    %v78 = vld [vmem:[#allocation8 + $0x30] sm:$0xff]
    %v79 = vld [vmem:[#allocation8 + $0x38] sm:$0xff]
    %v80 = vsub.f32 %v72, %v64
    %v81 = vsub.f32 %v73, %v65
    %v82 = vsub.f32 %v74, %v66
    %v83 = vsub.f32 %v75, %v67
    %v84 = vsub.f32 %v76, %v68
    %v85 = vsub.f32 %v77, %v69
    %v86 = vsub.f32 %v78, %v70
    %v87 = vsub.f32 %v79, %v71
    %v88 = vand.u32 2147483647, %v80
    %v89 = vand.u32 2147483647, %v81
    %v90 = vand.u32 2147483647, %v82
    %v91 = vand.u32 2147483647, %v83
    %v92 = vand.u32 2147483647, %v84
    %v93 = vand.u32 2147483647, %v85
    %v94 = vand.u32 2147483647, %v86
    %v95 = vand.u32 2147483647, %v87
    %vm96 = vcmask 130048
    %v97 = vsel %vm96, %v88, 0.0
    %v98 = vsel %vm96, %v89, 0.0
    %v99 = vadd.f32 %v97, %v98
    %v100 = vsel %vm96, %v90, 0.0
    %v101 = vadd.f32 %v99, %v100
    %v102 = vsel %vm96, %v91, 0.0
    %v103 = vadd.f32 %v101, %v102
    %v104 = vsel %vm96, %v92, 0.0
    %v105 = vadd.f32 %v103, %v104
    %v106 = vsel %vm96, %v93, 0.0
    %v107 = vadd.f32 %v105, %v106
    %v108 = vsel %vm96, %v94, 0.0
    %v109 = vadd.f32 %v107, %v108
    %v110 = vsel %vm96, %v95, 0.0
    %v111 = vadd.f32 %v109, %v110
    %112 = vadd.xlane.f32.xlu0 %v111
    %v113 = vpop.xlane.xlu0 %112
    %v114 = vrot.slane %v113, 4
    %v115 = vadd.f32 %v113, %v114
    %v116 = vrot.slane %v115, 2
    %v117 = vadd.f32 %v115, %v116
    %v118 = vrot.slane %v117, 1
    %v119 = vadd.f32 %v117, %v118
    %s120 = vtos %v119
    %v121 = vrot.slane %v72, 7
    %v122 = vrot.slane %v76, 7
    %v123 = vrot.slane %v73, 7
    %v124 = vrot.slane %v77, 7
    %v125 = vlaneseq
    %v126 = vshrl.u32 %v125, 7
    %vm127 = vcmp.lt.s32.totalorder %v126, 1
    %v128 = vsel %vm127, %v121, %v123
    %v129 = vsel %vm127, %v122, %v124
    %v130 = vsel %vm127, %v123, %v121
    %v131 = vsel %vm127, %v124, %v122
    %v132 = vrot.slane %v72, 1
    %v133 = vrot.slane %v76, 1
    %v134 = vrot.slane %v73, 1
    %v135 = vrot.slane %v77, 1
    %vm136 = vcmp.lt.s32.totalorder %v126, 7
    %v137 = vsel %vm136, %v132, %v134
    %v138 = vsel %vm136, %v133, %v135
    %v139 = vsel %vm136, %v134, %v132
    %v140 = vsel %vm136, %v135, %v133
    %vm141 = vcmask 1047680
    %142 = vrot.lane.b32.xlu0 %v72, 16
    %v143 = vpop.permute.xlu0 %142
    %v144 = vsel %vm141, %v143, %v72
    %145 = vrot.lane.b32.xlu0 %v73, 16
    %v146 = vpop.permute.xlu0 %145
    %v147 = vsel %vm141, %v146, %v73
    %148 = vrot.lane.b32.xlu0 %v76, 16
    %v149 = vpop.permute.xlu0 %148
    %v150 = vsel %vm141, %v149, %v76
    %151 = vrot.lane.b32.xlu0 %v77, 16
    %v152 = vpop.permute.xlu0 %151
    %v153 = vsel %vm141, %v152, %v77
    %154 = vrot.lane.b32.xlu0 %v144, 16
    %v155 = vpop.permute.xlu0 %154
    %156 = vrot.lane.b32.xlu0 %v147, 16
    %v157 = vpop.permute.xlu0 %156
    %158 = vrot.lane.b32.xlu0 %v150, 16
    %v159 = vpop.permute.xlu0 %158
    %160 = vrot.lane.b32.xlu0 %v153, 16
    %v161 = vpop.permute.xlu0 %160
    %v162 = vsel %vm141, %v155, %v72
    %v163 = vsel %vm141, %v157, %v73
    %v164 = vsel %vm141, %v159, %v76
    %v165 = vsel %vm141, %v161, %v77
    %v166 = vrot.slane %v74, 7
    %v167 = vrot.slane %v78, 7
    %v168 = vrot.slane %v75, 7
    %v169 = vrot.slane %v79, 7
    %v170 = vsel %vm127, %v166, %v168
    %v171 = vsel %vm127, %v167, %v169
    %v172 = vsel %vm127, %v168, %v166
    %v173 = vsel %vm127, %v169, %v167
    %v174 = vrot.slane %v74, 1
    %v175 = vrot.slane %v78, 1
    %v176 = vrot.slane %v75, 1
    %v177 = vrot.slane %v79, 1
    %v178 = vsel %vm136, %v174, %v176
    %v179 = vsel %vm136, %v175, %v177
    %v180 = vsel %vm136, %v176, %v174
    %v181 = vsel %vm136, %v177, %v175
    %182 = vrot.lane.b32.xlu0 %v74, 16
    %v183 = vpop.permute.xlu0 %182
    %v184 = vsel %vm141, %v183, %v74
    %185 = vrot.lane.b32.xlu0 %v75, 16
    %v186 = vpop.permute.xlu0 %185
    %v187 = vsel %vm141, %v186, %v75
    %188 = vrot.lane.b32.xlu0 %v78, 16
    %v189 = vpop.permute.xlu0 %188
    %v190 = vsel %vm141, %v189, %v78
    %191 = vrot.lane.b32.xlu0 %v79, 16
    %v192 = vpop.permute.xlu0 %191
    %v193 = vsel %vm141, %v192, %v79
    %194 = vrot.lane.b32.xlu0 %v184, 16
    %v195 = vpop.permute.xlu0 %194
    %196 = vrot.lane.b32.xlu0 %v187, 16
    %v197 = vpop.permute.xlu0 %196
    %198 = vrot.lane.b32.xlu0 %v190, 16
    %v199 = vpop.permute.xlu0 %198
    %200 = vrot.lane.b32.xlu0 %v193, 16
    %v201 = vpop.permute.xlu0 %200
    %v202 = vsel %vm141, %v195, %v74
    %v203 = vsel %vm141, %v197, %v75
    %v204 = vsel %vm141, %v199, %v78
    %v205 = vsel %vm141, %v201, %v79
    %v206 = vrot.slane %v80, 7
    %v207 = vrot.slane %v84, 7
    %v208 = vrot.slane %v81, 7
    %v209 = vrot.slane %v85, 7
    %v210 = vsel %vm127, %v206, %v208
    %v211 = vsel %vm127, %v207, %v209
    %v212 = vsel %vm127, %v208, %v206
    %v213 = vsel %vm127, %v209, %v207
    %v214 = vrot.slane %v80, 1
    %v215 = vrot.slane %v84, 1
    %v216 = vrot.slane %v81, 1
    %v217 = vrot.slane %v85, 1
    %v218 = vsel %vm136, %v214, %v216
    %v219 = vsel %vm136, %v215, %v217
    %v220 = vsel %vm136, %v216, %v214
    %v221 = vsel %vm136, %v217, %v215
    %222 = vrot.lane.b32.xlu0 %v80, 16
    %v223 = vpop.permute.xlu0 %222
    %v224 = vsel %vm141, %v223, %v80
    %225 = vrot.lane.b32.xlu0 %v81, 16
    %v226 = vpop.permute.xlu0 %225
    %v227 = vsel %vm141, %v226, %v81
    %228 = vrot.lane.b32.xlu0 %v84, 16
    %v229 = vpop.permute.xlu0 %228
    %v230 = vsel %vm141, %v229, %v84
    %231 = vrot.lane.b32.xlu0 %v85, 16
    %v232 = vpop.permute.xlu0 %231
    %v233 = vsel %vm141, %v232, %v85
    %234 = vrot.lane.b32.xlu0 %v224, 16
    %v235 = vpop.permute.xlu0 %234
    %236 = vrot.lane.b32.xlu0 %v227, 16
    %v237 = vpop.permute.xlu0 %236
    %238 = vrot.lane.b32.xlu0 %v230, 16
    %v239 = vpop.permute.xlu0 %238
    %240 = vrot.lane.b32.xlu0 %v233, 16
    %v241 = vpop.permute.xlu0 %240
    %v242 = vsel %vm141, %v235, %v80
    %v243 = vsel %vm141, %v237, %v81
    %v244 = vsel %vm141, %v239, %v84
    %v245 = vsel %vm141, %v241, %v85
    %v246 = vrot.slane %v82, 7
    %v247 = vrot.slane %v86, 7
    %v248 = vrot.slane %v83, 7
    %v249 = vrot.slane %v87, 7
    %v250 = vsel %vm127, %v246, %v248
    %v251 = vsel %vm127, %v247, %v249
    %v252 = vsel %vm127, %v248, %v246
    %v253 = vsel %vm127, %v249, %v247
    %v254 = vrot.slane %v82, 1
    %v255 = vrot.slane %v86, 1
    %v256 = vrot.slane %v83, 1
    %v257 = vrot.slane %v87, 1
    %v258 = vsel %vm136, %v254, %v256
    %v259 = vsel %vm136, %v255, %v257
    %v260 = vsel %vm136, %v256, %v254
    %v261 = vsel %vm136, %v257, %v255
    %262 = vrot.lane.b32.xlu0 %v82, 16
    %v263 = vpop.permute.xlu0 %262
    %v264 = vsel %vm141, %v263, %v82
    %265 = vrot.lane.b32.xlu0 %v83, 16
    %v266 = vpop.permute.xlu0 %265
    %v267 = vsel %vm141, %v266, %v83
    %268 = vrot.lane.b32.xlu0 %v86, 16
    %v269 = vpop.permute.xlu0 %268
    %v270 = vsel %vm141, %v269, %v86
    %271 = vrot.lane.b32.xlu0 %v87, 16
    %v272 = vpop.permute.xlu0 %271
    %v273 = vsel %vm141, %v272, %v87
    %274 = vrot.lane.b32.xlu0 %v264, 16
    %v275 = vpop.permute.xlu0 %274
    %276 = vrot.lane.b32.xlu0 %v267, 16
    %v277 = vpop.permute.xlu0 %276
    %278 = vrot.lane.b32.xlu0 %v270, 16
    %v279 = vpop.permute.xlu0 %278
    %280 = vrot.lane.b32.xlu0 %v273, 16
    %v281 = vpop.permute.xlu0 %280
    %v282 = vsel %vm141, %v275, %v82
    %v283 = vsel %vm141, %v277, %v83
    %v284 = vsel %vm141, %v279, %v86
    %v285 = vsel %vm141, %v281, %v87
    %v286 = vsub.f32 %v218, %v212
    %v287 = vsub.f32 %v220, %v210
    %v288 = vsub.f32 %v219, %v213
    %v289 = vsub.f32 %v221, %v211
    %294 = vrot.lane.b32.xlu0 %v282, 114
    %v295 = vpop.permute.xlu0 %294
    %296 = vrot.lane.b32.xlu0 %v283, 114
    %v297 = vpop.permute.xlu0 %296
    %298 = vrot.lane.b32.xlu0 %v284, 114
    %v299 = vpop.permute.xlu0 %298
    %300 = vrot.lane.b32.xlu0 %v285, 114
    %v301 = vpop.permute.xlu0 %300
    %v306 = vsub.f32 %v282, %v295
    %v307 = vsub.f32 %v283, %v297
    %v308 = vsub.f32 %v284, %v299
    %v309 = vsub.f32 %v285, %v301
    %314 = vrot.lane.b32.xlu0 %v306, 127
    %v315 = vpop.permute.xlu0 %314
    %316 = vrot.lane.b32.xlu0 %v307, 127
    %v317 = vpop.permute.xlu0 %316
    %318 = vrot.lane.b32.xlu0 %v308, 127
    %v319 = vpop.permute.xlu0 %318
    %320 = vrot.lane.b32.xlu0 %v309, 127
    %v321 = vpop.permute.xlu0 %320
    %v326 = vadd.f32 %v286, %v315
    %v327 = vadd.f32 %v287, %v317
    %v328 = vadd.f32 %v288, %v319
    %v329 = vadd.f32 %v289, %v321
    %v330 = vmul.f32 %v326, 0.5
    %v331 = vmul.f32 %v327, 0.5
    %v332 = vmul.f32 %v328, 0.5
    %v333 = vmul.f32 %v329, 0.5
    %v334 = vadd.f32 %v218, %v212
    %v335 = vadd.f32 %v220, %v210
    %v336 = vadd.f32 %v219, %v213
    %v337 = vadd.f32 %v221, %v211
    %342 = vrot.lane.b32.xlu0 %v242, 114
    %v343 = vpop.permute.xlu0 %342
    %344 = vrot.lane.b32.xlu0 %v243, 114
    %v345 = vpop.permute.xlu0 %344
    %346 = vrot.lane.b32.xlu0 %v244, 114
    %v347 = vpop.permute.xlu0 %346
    %348 = vrot.lane.b32.xlu0 %v245, 114
    %v349 = vpop.permute.xlu0 %348
    %v354 = vadd.f32 %v242, %v343
    %v355 = vadd.f32 %v243, %v345
    %v356 = vadd.f32 %v244, %v347
    %v357 = vadd.f32 %v245, %v349
    %362 = vrot.lane.b32.xlu0 %v354, 127
    %v363 = vpop.permute.xlu0 %362
    %364 = vrot.lane.b32.xlu0 %v355, 127
    %v365 = vpop.permute.xlu0 %364
    %366 = vrot.lane.b32.xlu0 %v356, 127
    %v367 = vpop.permute.xlu0 %366
    %368 = vrot.lane.b32.xlu0 %v357, 127
    %v369 = vpop.permute.xlu0 %368
    %v374 = vadd.f32 %v334, %v363
    %v375 = vadd.f32 %v335, %v365
    %v376 = vadd.f32 %v336, %v367
    %v377 = vadd.f32 %v337, %v369
    %v378 = vmul.f32 %v80, 4.0
    %v379 = vmul.f32 %v81, 4.0
    %v380 = vmul.f32 %v84, 4.0
    %v381 = vmul.f32 %v85, 4.0
    %v382 = vsub.f32 %v374, %v378
    %v383 = vsub.f32 %v375, %v379
    %v384 = vsub.f32 %v376, %v380
    %v385 = vsub.f32 %v377, %v381
    %v386 = vadd.f32 %v258, %v252
    %v387 = vadd.f32 %v260, %v250
    %v388 = vadd.f32 %v259, %v253
    %v389 = vadd.f32 %v261, %v251
    %v390 = vadd.f32 %v282, %v295
    %v391 = vadd.f32 %v283, %v297
    %v392 = vadd.f32 %v284, %v299
    %v393 = vadd.f32 %v285, %v301
    %398 = vrot.lane.b32.xlu0 %v390, 127
    %v399 = vpop.permute.xlu0 %398
    %400 = vrot.lane.b32.xlu0 %v391, 127
    %v401 = vpop.permute.xlu0 %400
    %402 = vrot.lane.b32.xlu0 %v392, 127
    %v403 = vpop.permute.xlu0 %402
    %404 = vrot.lane.b32.xlu0 %v393, 127
    %v405 = vpop.permute.xlu0 %404
    %v410 = vadd.f32 %v386, %v399
    %v411 = vadd.f32 %v387, %v401
    %v412 = vadd.f32 %v388, %v403
    %v413 = vadd.f32 %v389, %v405
    %v414 = vmul.f32 %v82, 4.0
    %v415 = vmul.f32 %v83, 4.0
    %v416 = vmul.f32 %v86, 4.0
    %v417 = vmul.f32 %v87, 4.0
    %v418 = vsub.f32 %v410, %v414
    %v419 = vsub.f32 %v411, %v415
    %v420 = vsub.f32 %v412, %v416
    %v421 = vsub.f32 %v413, %v417
    %v422 = vsub.f32 %v137, %v130
    %v423 = vsub.f32 %v139, %v128
    %v424 = vsub.f32 %v138, %v131
    %v425 = vsub.f32 %v140, %v129
    %v426 = vadd.f32 %v137, %v130
    %v427 = vadd.f32 %v139, %v128
    %v428 = vadd.f32 %v138, %v131
    %v429 = vadd.f32 %v140, %v129
    %v430 = vmul.f32 %v72, 2.0
    %v431 = vmul.f32 %v73, 2.0
    %v432 = vmul.f32 %v76, 2.0
    %v433 = vmul.f32 %v77, 2.0
    %v434 = vadd.f32 %v426, %v430
    %v435 = vadd.f32 %v427, %v431
    %v436 = vadd.f32 %v428, %v432
    %v437 = vadd.f32 %v429, %v433
    %v438 = vmul.f32 %v80, 2.0
    %v439 = vmul.f32 %v81, 2.0
    %v440 = vmul.f32 %v84, 2.0
    %v441 = vmul.f32 %v85, 2.0
    %v442 = vadd.f32 %v334, %v438
    %v443 = vadd.f32 %v335, %v439
    %v444 = vadd.f32 %v336, %v440
    %v445 = vadd.f32 %v337, %v441
    %v446 = vmul.f32 %v422, %v442
    %v447 = vmul.f32 %v423, %v443
    %v448 = vmul.f32 %v424, %v444
    %v449 = vmul.f32 %v425, %v445
    %v450 = vmul.f32 %v286, %v434
    %v451 = vmul.f32 %v287, %v435
    %v452 = vmul.f32 %v288, %v436
    %v453 = vmul.f32 %v289, %v437
    %v454 = vadd.f32 %v446, %v450
    %v455 = vadd.f32 %v447, %v451
    %v456 = vadd.f32 %v448, %v452
    %v457 = vadd.f32 %v449, %v453
    %v458 = vmul.f32 %v286, %v442
    %v459 = vmul.f32 %v287, %v443
    %v460 = vmul.f32 %v288, %v444
    %v461 = vmul.f32 %v289, %v445
    %v462 = vsub.f32 %v454, %v458
    %v463 = vsub.f32 %v455, %v459
    %v464 = vsub.f32 %v456, %v460
    %v465 = vsub.f32 %v457, %v461
    %470 = vrot.lane.b32.xlu0 %v72, 1
    %v471 = vpop.permute.xlu0 %470
    %472 = vrot.lane.b32.xlu0 %v73, 1
    %v473 = vpop.permute.xlu0 %472
    %474 = vrot.lane.b32.xlu0 %v76, 1
    %v475 = vpop.permute.xlu0 %474
    %476 = vrot.lane.b32.xlu0 %v77, 1
    %v477 = vpop.permute.xlu0 %476
    %v482 = vadd.f32 %v162, %v471
    %v483 = vadd.f32 %v163, %v473
    %v484 = vadd.f32 %v164, %v475
    %v485 = vadd.f32 %v165, %v477
    %490 = vrot.lane.b32.xlu0 %v80, 1
    %v491 = vpop.permute.xlu0 %490
    %492 = vrot.lane.b32.xlu0 %v81, 1
    %v493 = vpop.permute.xlu0 %492
    %494 = vrot.lane.b32.xlu0 %v84, 1
    %v495 = vpop.permute.xlu0 %494
    %496 = vrot.lane.b32.xlu0 %v85, 1
    %v497 = vpop.permute.xlu0 %496
    %v502 = vadd.f32 %v242, %v491
    %v503 = vadd.f32 %v243, %v493
    %v504 = vadd.f32 %v244, %v495
    %v505 = vadd.f32 %v245, %v497
    %510 = vrot.lane.b32.xlu0 %v74, 1
    %v511 = vpop.permute.xlu0 %510
    %512 = vrot.lane.b32.xlu0 %v75, 1
    %v513 = vpop.permute.xlu0 %512
    %514 = vrot.lane.b32.xlu0 %v78, 1
    %v515 = vpop.permute.xlu0 %514
    %516 = vrot.lane.b32.xlu0 %v79, 1
    %v517 = vpop.permute.xlu0 %516
    %v522 = vadd.f32 %v202, %v511
    %v523 = vadd.f32 %v203, %v513
    %v524 = vadd.f32 %v204, %v515
    %v525 = vadd.f32 %v205, %v517
    %530 = vrot.lane.b32.xlu0 %v82, 1
    %v531 = vpop.permute.xlu0 %530
    %532 = vrot.lane.b32.xlu0 %v83, 1
    %v533 = vpop.permute.xlu0 %532
    %534 = vrot.lane.b32.xlu0 %v86, 1
    %v535 = vpop.permute.xlu0 %534
    %536 = vrot.lane.b32.xlu0 %v87, 1
    %v537 = vpop.permute.xlu0 %536
    %v542 = vadd.f32 %v282, %v531
    %v543 = vadd.f32 %v283, %v533
    %v544 = vadd.f32 %v284, %v535
    %v545 = vadd.f32 %v285, %v537
    %v546 = vmul.f32 %v482, %v542
    %v547 = vmul.f32 %v483, %v543
    %v548 = vmul.f32 %v484, %v544
    %v549 = vmul.f32 %v485, %v545
    %v550 = vmul.f32 %v502, %v522
    %v551 = vmul.f32 %v503, %v523
    %v552 = vmul.f32 %v504, %v524
    %v553 = vmul.f32 %v505, %v525
    %v554 = vadd.f32 %v546, %v550
    %v555 = vadd.f32 %v547, %v551
    %v556 = vadd.f32 %v548, %v552
    %v557 = vadd.f32 %v549, %v553
    %v558 = vmul.f32 %v502, %v542
    %v559 = vmul.f32 %v503, %v543
    %v560 = vmul.f32 %v504, %v544
    %v561 = vmul.f32 %v505, %v545
    %v562 = vsub.f32 %v554, %v558
    %v563 = vsub.f32 %v555, %v559
    %v564 = vsub.f32 %v556, %v560
    %v565 = vsub.f32 %v557, %v561
    %570 = vrot.lane.b32.xlu0 %v562, 127
    %v571 = vpop.permute.xlu0 %570
    %572 = vrot.lane.b32.xlu0 %v563, 127
    %v573 = vpop.permute.xlu0 %572
    %574 = vrot.lane.b32.xlu0 %v564, 127
    %v575 = vpop.permute.xlu0 %574
    %576 = vrot.lane.b32.xlu0 %v565, 127
    %v577 = vpop.permute.xlu0 %576
    %v582 = vadd.f32 %v462, %v571
    %v583 = vadd.f32 %v463, %v573
    %v584 = vadd.f32 %v464, %v575
    %v585 = vadd.f32 %v465, %v577
    %586 = vrot.lane.b32.xlu0 %v72, 15
    %v587 = vpop.permute.xlu0 %586
    %588 = vrot.lane.b32.xlu0 %v73, 15
    %v589 = vpop.permute.xlu0 %588
    %590 = vrot.lane.b32.xlu0 %v76, 15
    %v591 = vpop.permute.xlu0 %590
    %592 = vrot.lane.b32.xlu0 %v77, 15
    %v593 = vpop.permute.xlu0 %592
    %v598 = vadd.f32 %v162, %v587
    %v599 = vadd.f32 %v163, %v589
    %v600 = vadd.f32 %v164, %v591
    %v601 = vadd.f32 %v165, %v593
    %602 = vrot.lane.b32.xlu0 %v80, 15
    %v603 = vpop.permute.xlu0 %602
    %604 = vrot.lane.b32.xlu0 %v81, 15
    %v605 = vpop.permute.xlu0 %604
    %606 = vrot.lane.b32.xlu0 %v84, 15
    %v607 = vpop.permute.xlu0 %606
    %608 = vrot.lane.b32.xlu0 %v85, 15
    %v609 = vpop.permute.xlu0 %608
    %v614 = vadd.f32 %v242, %v603
    %v615 = vadd.f32 %v243, %v605
    %v616 = vadd.f32 %v244, %v607
    %v617 = vadd.f32 %v245, %v609
    %618 = vrot.lane.b32.xlu0 %v74, 15
    %v619 = vpop.permute.xlu0 %618
    %620 = vrot.lane.b32.xlu0 %v75, 15
    %v621 = vpop.permute.xlu0 %620
    %622 = vrot.lane.b32.xlu0 %v78, 15
    %v623 = vpop.permute.xlu0 %622
    %624 = vrot.lane.b32.xlu0 %v79, 15
    %v625 = vpop.permute.xlu0 %624
    %v630 = vadd.f32 %v202, %v619
    %v631 = vadd.f32 %v203, %v621
    %v632 = vadd.f32 %v204, %v623
    %v633 = vadd.f32 %v205, %v625
    %634 = vrot.lane.b32.xlu0 %v82, 15
    %v635 = vpop.permute.xlu0 %634
    %636 = vrot.lane.b32.xlu0 %v83, 15
    %v637 = vpop.permute.xlu0 %636
    %638 = vrot.lane.b32.xlu0 %v86, 15
    %v639 = vpop.permute.xlu0 %638
    %640 = vrot.lane.b32.xlu0 %v87, 15
    %v641 = vpop.permute.xlu0 %640
    %v646 = vadd.f32 %v282, %v635
    %v647 = vadd.f32 %v283, %v637
    %v648 = vadd.f32 %v284, %v639
    %v649 = vadd.f32 %v285, %v641
    %v650 = vmul.f32 %v598, %v646
    %v651 = vmul.f32 %v599, %v647
    %v652 = vmul.f32 %v600, %v648
    %v653 = vmul.f32 %v601, %v649
    %v654 = vmul.f32 %v614, %v630
    %v655 = vmul.f32 %v615, %v631
    %v656 = vmul.f32 %v616, %v632
    %v657 = vmul.f32 %v617, %v633
    %v658 = vadd.f32 %v650, %v654
    %v659 = vadd.f32 %v651, %v655
    %v660 = vadd.f32 %v652, %v656
    %v661 = vadd.f32 %v653, %v657
    %v662 = vmul.f32 %v614, %v646
    %v663 = vmul.f32 %v615, %v647
    %v664 = vmul.f32 %v616, %v648
    %v665 = vmul.f32 %v617, %v649
    %v666 = vsub.f32 %v658, %v662
    %v667 = vsub.f32 %v659, %v663
    %v668 = vsub.f32 %v660, %v664
    %v669 = vsub.f32 %v661, %v665
    %674 = vrot.lane.b32.xlu0 %v666, 113
    %v675 = vpop.permute.xlu0 %674
    %676 = vrot.lane.b32.xlu0 %v667, 113
    %v677 = vpop.permute.xlu0 %676
    %678 = vrot.lane.b32.xlu0 %v668, 113
    %v679 = vpop.permute.xlu0 %678
    %680 = vrot.lane.b32.xlu0 %v669, 113
    %v681 = vpop.permute.xlu0 %680
    %v686 = vsub.f32 %v582, %v675
    %v687 = vsub.f32 %v583, %v677
    %v688 = vsub.f32 %v584, %v679
    %v689 = vsub.f32 %v585, %v681
    %v690 = vmul.f32 %v686, 0.25
    %v691 = vmul.f32 %v687, 0.25
    %v692 = vmul.f32 %v688, 0.25
    %v693 = vmul.f32 %v689, 0.25
    %698 = vrot.lane.b32.xlu0 %v202, 114
    %v699 = vpop.permute.xlu0 %698
    %700 = vrot.lane.b32.xlu0 %v203, 114
    %v701 = vpop.permute.xlu0 %700
    %702 = vrot.lane.b32.xlu0 %v204, 114
    %v703 = vpop.permute.xlu0 %702
    %704 = vrot.lane.b32.xlu0 %v205, 114
    %v705 = vpop.permute.xlu0 %704
    %v710 = vsub.f32 %v202, %v699
    %v711 = vsub.f32 %v203, %v701
    %v712 = vsub.f32 %v204, %v703
    %v713 = vsub.f32 %v205, %v705
    %v714 = vadd.f32 %v202, %v699
    %v715 = vadd.f32 %v203, %v701
    %v716 = vadd.f32 %v204, %v703
    %v717 = vadd.f32 %v205, %v705
    %v718 = vmul.f32 %v74, 2.0
    %v719 = vmul.f32 %v75, 2.0
    %v720 = vmul.f32 %v78, 2.0
    %v721 = vmul.f32 %v79, 2.0
    %726 = vrot.lane.b32.xlu0 %v718, 1
    %v727 = vpop.permute.xlu0 %726
    %728 = vrot.lane.b32.xlu0 %v719, 1
    %v729 = vpop.permute.xlu0 %728
    %730 = vrot.lane.b32.xlu0 %v720, 1
    %v731 = vpop.permute.xlu0 %730
    %732 = vrot.lane.b32.xlu0 %v721, 1
    %v733 = vpop.permute.xlu0 %732
    %v738 = vadd.f32 %v714, %v727
    %v739 = vadd.f32 %v715, %v729
    %v740 = vadd.f32 %v716, %v731
    %v741 = vadd.f32 %v717, %v733
    %v742 = vmul.f32 %v82, 2.0
    %v743 = vmul.f32 %v83, 2.0
    %v744 = vmul.f32 %v86, 2.0
    %v745 = vmul.f32 %v87, 2.0
    %750 = vrot.lane.b32.xlu0 %v742, 1
    %v751 = vpop.permute.xlu0 %750
    %752 = vrot.lane.b32.xlu0 %v743, 1
    %v753 = vpop.permute.xlu0 %752
    %754 = vrot.lane.b32.xlu0 %v744, 1
    %v755 = vpop.permute.xlu0 %754
    %756 = vrot.lane.b32.xlu0 %v745, 1
    %v757 = vpop.permute.xlu0 %756
    %v762 = vadd.f32 %v390, %v751
    %v763 = vadd.f32 %v391, %v753
    %v764 = vadd.f32 %v392, %v755
    %v765 = vadd.f32 %v393, %v757
    %v766 = vmul.f32 %v710, %v762
    %v767 = vmul.f32 %v711, %v763
    %v768 = vmul.f32 %v712, %v764
    %v769 = vmul.f32 %v713, %v765
    %v770 = vmul.f32 %v306, %v738
    %v771 = vmul.f32 %v307, %v739
    %v772 = vmul.f32 %v308, %v740
    %v773 = vmul.f32 %v309, %v741
    %v774 = vadd.f32 %v766, %v770
    %v775 = vadd.f32 %v767, %v771
    %v776 = vadd.f32 %v768, %v772
    %v777 = vadd.f32 %v769, %v773
    %v778 = vmul.f32 %v306, %v762
    %v779 = vmul.f32 %v307, %v763
    %v780 = vmul.f32 %v308, %v764
    %v781 = vmul.f32 %v309, %v765
    %v782 = vsub.f32 %v774, %v778
    %v783 = vsub.f32 %v775, %v779
    %v784 = vsub.f32 %v776, %v780
    %v785 = vsub.f32 %v777, %v781
    %v786 = vadd.f32 %v178, %v74
    %v787 = vadd.f32 %v180, %v75
    %v788 = vadd.f32 %v179, %v78
    %v789 = vadd.f32 %v181, %v79
    %v790 = vadd.f32 %v258, %v82
    %v791 = vadd.f32 %v260, %v83
    %v792 = vadd.f32 %v259, %v86
    %v793 = vadd.f32 %v261, %v87
    %v794 = vadd.f32 %v137, %v72
    %v795 = vadd.f32 %v139, %v73
    %v796 = vadd.f32 %v138, %v76
    %v797 = vadd.f32 %v140, %v77
    %v798 = vadd.f32 %v218, %v80
    %v799 = vadd.f32 %v220, %v81
    %v800 = vadd.f32 %v219, %v84
    %v801 = vadd.f32 %v221, %v85
    %v802 = vmul.f32 %v786, %v798
    %v803 = vmul.f32 %v787, %v799
    %v804 = vmul.f32 %v788, %v800
    %v805 = vmul.f32 %v789, %v801
    %v806 = vmul.f32 %v790, %v794
    %v807 = vmul.f32 %v791, %v795
    %v808 = vmul.f32 %v792, %v796
    %v809 = vmul.f32 %v793, %v797
    %v810 = vadd.f32 %v802, %v806
    %v811 = vadd.f32 %v803, %v807
    %v812 = vadd.f32 %v804, %v808
    %v813 = vadd.f32 %v805, %v809
    %v814 = vmul.f32 %v790, %v798
    %v815 = vmul.f32 %v791, %v799
    %v816 = vmul.f32 %v792, %v800
    %v817 = vmul.f32 %v793, %v801
    %v818 = vsub.f32 %v810, %v814
    %v819 = vsub.f32 %v811, %v815
    %v820 = vsub.f32 %v812, %v816
    %v821 = vsub.f32 %v813, %v817
    %826 = vrot.lane.b32.xlu0 %v818, 1
    %v827 = vpop.permute.xlu0 %826
    %828 = vrot.lane.b32.xlu0 %v819, 1
    %v829 = vpop.permute.xlu0 %828
    %830 = vrot.lane.b32.xlu0 %v820, 1
    %v831 = vpop.permute.xlu0 %830
    %832 = vrot.lane.b32.xlu0 %v821, 1
    %v833 = vpop.permute.xlu0 %832
    %v838 = vadd.f32 %v782, %v827
    %v839 = vadd.f32 %v783, %v829
    %v840 = vadd.f32 %v784, %v831
    %v841 = vadd.f32 %v785, %v833
    %v842 = vadd.f32 %v172, %v74
    %v843 = vadd.f32 %v170, %v75
    %v844 = vadd.f32 %v173, %v78
    %v845 = vadd.f32 %v171, %v79
    %v846 = vadd.f32 %v252, %v82
    %v847 = vadd.f32 %v250, %v83
    %v848 = vadd.f32 %v253, %v86
    %v849 = vadd.f32 %v251, %v87
    %v850 = vadd.f32 %v130, %v72
    %v851 = vadd.f32 %v128, %v73
    %v852 = vadd.f32 %v131, %v76
    %v853 = vadd.f32 %v129, %v77
    %v854 = vadd.f32 %v212, %v80
    %v855 = vadd.f32 %v210, %v81
    %v856 = vadd.f32 %v213, %v84
    %v857 = vadd.f32 %v211, %v85
    %v858 = vmul.f32 %v842, %v854
    %v859 = vmul.f32 %v843, %v855
    %v860 = vmul.f32 %v844, %v856
    %v861 = vmul.f32 %v845, %v857
    %v862 = vmul.f32 %v846, %v850
    %v863 = vmul.f32 %v847, %v851
    %v864 = vmul.f32 %v848, %v852
    %v865 = vmul.f32 %v849, %v853
    %v866 = vadd.f32 %v858, %v862
    %v867 = vadd.f32 %v859, %v863
    %v868 = vadd.f32 %v860, %v864
    %v869 = vadd.f32 %v861, %v865
    %v870 = vmul.f32 %v846, %v854
    %v871 = vmul.f32 %v847, %v855
    %v872 = vmul.f32 %v848, %v856
    %v873 = vmul.f32 %v849, %v857
    %v874 = vsub.f32 %v866, %v870
    %v875 = vsub.f32 %v867, %v871
    %v876 = vsub.f32 %v868, %v872
    %v877 = vsub.f32 %v869, %v873
    %882 = vrot.lane.b32.xlu0 %v874, 1
    %v883 = vpop.permute.xlu0 %882
    %884 = vrot.lane.b32.xlu0 %v875, 1
    %v885 = vpop.permute.xlu0 %884
    %886 = vrot.lane.b32.xlu0 %v876, 1
    %v887 = vpop.permute.xlu0 %886
    %888 = vrot.lane.b32.xlu0 %v877, 1
    %v889 = vpop.permute.xlu0 %888
    %v894 = vsub.f32 %v838, %v883
    %v895 = vsub.f32 %v839, %v885
    %v896 = vsub.f32 %v840, %v887
    %v897 = vsub.f32 %v841, %v889
    %v898 = vmul.f32 %v894, 0.25
    %v899 = vmul.f32 %v895, 0.25
    %v900 = vmul.f32 %v896, 0.25
    %v901 = vmul.f32 %v897, 0.25
    %v902 = vmul.f32 %v382, 0.0025
    %v903 = vmul.f32 %v383, 0.0025
    %v904 = vmul.f32 %v384, 0.0025
    %v905 = vmul.f32 %v385, 0.0025
    %v906 = vsub.f32 %v690, %v902
    %v907 = vsub.f32 %v691, %v903
    %v908 = vsub.f32 %v692, %v904
    %v909 = vsub.f32 %v693, %v905
    %v910 = vmul.f32 %v418, 0.0025
    %v911 = vmul.f32 %v419, 0.0025
    %v912 = vmul.f32 %v420, 0.0025
    %v913 = vmul.f32 %v421, 0.0025
    %918 = vrot.lane.b32.xlu0 %v910, 1
    %v919 = vpop.permute.xlu0 %918
    %920 = vrot.lane.b32.xlu0 %v911, 1
    %v921 = vpop.permute.xlu0 %920
    %922 = vrot.lane.b32.xlu0 %v912, 1
    %v923 = vpop.permute.xlu0 %922
    %924 = vrot.lane.b32.xlu0 %v913, 1
    %v925 = vpop.permute.xlu0 %924
    %v930 = vsub.f32 %v898, %v919
    %v931 = vsub.f32 %v899, %v921
    %v932 = vsub.f32 %v900, %v923
    %v933 = vsub.f32 %v901, %v925
    %v934 = vld [vmem:[#allocation3] sm:$0xff]
    %v935 = vld [vmem:[#allocation3 + $0x8] sm:$0xff]
    %v936 = vand.u32 2147483647, %v330
    %v937 = vand.u32 2147483647, %v331
    %v938 = vand.u32 2147483647, %v332
    %v939 = vand.u32 2147483647, %v333
    %v940 = vand.u32 2147483647, %v906
    %v941 = vand.u32 2147483647, %v907
    %v942 = vand.u32 2147483647, %v908
    %v943 = vand.u32 2147483647, %v909
    %v944 = vand.u32 2147483647, %v930
    %v945 = vand.u32 2147483647, %v931
    %v946 = vand.u32 2147483647, %v932
    %v947 = vand.u32 2147483647, %v933
    %952 = vrot.lane.b32.xlu0 %v944, 127
    %v953 = vpop.permute.xlu0 %952
    %954 = vrot.lane.b32.xlu0 %v945, 127
    %v955 = vpop.permute.xlu0 %954
    %956 = vrot.lane.b32.xlu0 %v946, 127
    %v957 = vpop.permute.xlu0 %956
    %958 = vrot.lane.b32.xlu0 %v947, 127
    %v959 = vpop.permute.xlu0 %958
    %v964 = vadd.f32 %v940, %v953
    %v965 = vadd.f32 %v941, %v955
    %v966 = vadd.f32 %v942, %v957
    %v967 = vadd.f32 %v943, %v959
    %v968 = vmul.f32 %v964, 5.0
    %v969 = vmul.f32 %v965, 5.0
    %v970 = vmul.f32 %v966, 5.0
    %v971 = vmul.f32 %v967, 5.0
    %v972 = vadd.f32 %v936, %v968
    %v973 = vadd.f32 %v937, %v969
    %v974 = vadd.f32 %v938, %v970
    %v975 = vadd.f32 %v939, %v971
    %v976 = vmul.f32 %v934, %v972
    %v977 = vmul.f32 %v935, %v973
    %v978 = vmul.f32 %v934, %v974
    %v979 = vmul.f32 %v935, %v975
    %v980 = vsel %vm96, %v976, 0.0
    %v981 = vsel %vm96, %v977, 0.0
    %v982 = vadd.f32 %v980, %v981
    %v983 = vsel %vm96, %v978, 0.0
    %v984 = vadd.f32 %v982, %v983
    %v985 = vsel %vm96, %v979, 0.0
    %v986 = vadd.f32 %v984, %v985
    %987 = vadd.xlane.f32.xlu0 %v986
    %v988 = vpop.xlane.xlu0 %987
    %v989 = vrot.slane %v988, 4
    %v990 = vadd.f32 %v988, %v989
    %v991 = vrot.slane %v990, 2
    %v992 = vadd.f32 %v990, %v991
    %v993 = vrot.slane %v992, 1
    %v994 = vadd.f32 %v992, %v993
    %s995 = vtos %v994
    %s996 = sld [smem:[#allocation2]]
    %s997 = sadd.f32 %s996, %s995
    %s998 = scalar_lea.smem [#allocation2], 0
    %999 = sst [smem:[%s998]] %s997
    %s1000 = sld [smem:[#allocation2 + $0x1]]
    %s1001 = sadd.f32 %s1000, %s120
    %s1002 = scalar_lea.smem [#allocation2], 1
    %1003 = sst [smem:[%s1002]] %s1001
    // Predicated region
    $region30: #{tpu_custom_call.1} parent=1 // pred_check
      %p1004 = pneg %p56
    $region31: #{tpu_custom_call.1} parent=1 // pred_check_branch
      %1006 = sbr.rel (%p1004) target = $region33
    $region32: #{tpu_custom_call.1} parent=1 // pred_region
      %s1007 = sld [smem:[#allocation2]]
      %s1008 = smul.f32 %s1007, 5.0
      %v1009 = vrcp.pop 392.0
      %s1010 = vtos %v1009
      %s1011 = smul.f32 %s1008, %s1010
      %s1012 = sld [smem:[#allocation2 + $0x1]]
      %v1013 = vrcp.pop 1024.0
      %s1014 = vtos %v1013
      %s1015 = smul.f32 %s1012, %s1014
      %s1016 = sadd.f32 %s1011, %s1015
      %v1017 = vrcp.pop 3.0
      %s1018 = vtos %v1017
      %s1019 = smul.f32 %s1016, %s1018
      %s1020 = scalar_lea.smem [#allocation9], 0
      %1021 = sst [smem:[%s1020]] %s1019
    $region33: #{tpu_custom_call.1} parent=1 // pred_fallthru
      _
    // Predicated region
    $region34: #{tpu_custom_call.1} parent=1 // pred_check
      _
    $region35: #{tpu_custom_call.1} parent=1 // pred_check_branch
      %1023 = sbr.rel (0) target = $region37
    $region36: #{tpu_custom_call.1} parent=1 // pred_region
      %s1025 = ssub.s32 16, 16
      %1026 = vsyncadd [#allocation5], %s1025
      %1029 = dma.smem_to_hbm [#allocation9], 16, %s3, [#allocation5]
    $region37: #{tpu_custom_call.1} parent=1 // pred_fallthru
      _
    // Predicated region
    $region38: #{tpu_custom_call.1} parent=1 // pred_check
      _
    $region39: #{tpu_custom_call.1} parent=1 // pred_check_branch
      %1031 = sbr.rel (0) target = $region41
    $region40: #{tpu_custom_call.1} parent=1 // pred_region
      %1032 = dma.done [#allocation5], 16
    $region41: #{tpu_custom_call.1} parent=1 // pred_fallthru
      _
    %1033 = sfence
    %1034 = vsyncpa [#allocation4], 1
    %1035 = vsyncpa [#allocation7], 1
    %1036 = vsyncpa [#allocation5], 1

</llo_original>
